<compile_context>
chip_gen: v6e
topology: v6e:2x2x1
jax: 0.10.0
libtpu: 0.0.40
codegen_flags: <defaults>
</compile_context>

<pallas_src>
import jax
import jax.numpy as jnp
import numpy as np
from jax.experimental import pallas as pl
from jax.experimental.pallas import tpu as pltpu  # noqa: F401  (TPU backend)

LANE = 128


def _round_up(n, m):
    return ((n + m - 1) // m) * m


def _pad2(a, rows, cols):
    return jnp.pad(a, ((0, rows - a.shape[0]), (0, cols - a.shape[1])))


def _full_spec(shape):
    # Single-program kernel: block == full array, resident in VMEM.
    return pl.BlockSpec(shape, lambda: tuple(0 for _ in shape))


# ---------------------------------------------------------------------------
# Fused Pallas kernel: all EdgeConv layers + (optional) final Linear
# ---------------------------------------------------------------------------

def make_fused_kernel(num_layers, cat, lin, pad_width):
    n_final = (num_layers + 1) if cat else 1

    def kernel(*refs):
        out_ref = refs[-1]
        x_ref, adj_ref, invdeg_ref, mask_ref = refs[0:4]
        pos = 4
        conv_refs = []
        for _ in range(num_layers):
            conv_refs.append(refs[pos:pos + 3])
            pos += 3
        if lin:
            wf_refs = refs[pos:pos + n_final]
            bf_ref = refs[pos + n_final]

        adj = adj_ref[...]          # [Np, Np] edge-count matrix (MXU dtype)
        inv_deg = invdeg_ref[...]   # [Np, 1] f32   (1 / max(deg, 1))
        mask = mask_ref[...]        # [Np, 1] f32   (deg > 0)

        h = x_ref[...]              # [Np, P] f32, padded channels are zero
        xs = [h]
        for wd_ref, w2_ref, b_ref in conv_refs:
            hm = h.astype(wd_ref.dtype)                       # bf16 (or f32) MXU input
            self_t = jnp.dot(hm, wd_ref[...],                 # x_i @ (W1 - W2)
                             preferred_element_type=jnp.float32)
            nbr = jnp.dot(hm, w2_ref[...],                    # X @ W2
                          preferred_element_type=jnp.float32)
            agg = jnp.dot(adj, nbr.astype(adj.dtype),         # sum over in-neighbors
                          preferred_element_type=jnp.float32)
            # f32 epilogue: bias, isolated-node mask, mean normalization, ReLU.
            h = jnp.maximum(mask * (self_t + b_ref[...]) + inv_deg * agg, 0.0)
            xs.append(h)

        feats = xs if cat else [xs[-1]]
        if lin:
            acc = bf_ref[...]                                 # [1, P] f32, broadcasts
            for f, wf_ref in zip(feats, wf_refs):
                acc = acc + jnp.dot(f.astype(wf_ref.dtype), wf_ref[...],
                                    preferred_element_type=jnp.float32)
            out_ref[...] = acc
        else:
            for k, f in enumerate(feats):
                out_ref[:, k * pad_width:(k + 1) * pad_width] = f

    return kernel


# ---------------------------------------------------------------------------
# Parameter init (deterministic, PyTorch-Linear-style uniform bounds)
# ---------------------------------------------------------------------------

def init_params(key, in_channels, out_channels, num_layers, cat=True, lin=True):
    params = {"convs": []}
    c = in_channels
    for _ in range(num_layers):
        key, kw, kb = jax.random.split(key, 3)
        fan_in = 2 * c
        bound = 1.0 / np.sqrt(fan_in)
        w = jax.random.uniform(kw, (2 * c, out_channels), jnp.float32, -bound, bound)
        b = jax.random.uniform(kb, (1, out_channels), jnp.float32, -bound, bound)
        params["convs"].append((w, b))
        c = out_channels
    if cat:
        c = in_channels + num_layers * out_channels
    if lin:
        key, kw, kb = jax.random.split(key, 3)
        bound = 1.0 / np.sqrt(c)
        params["final"] = (
            jax.random.uniform(kw, (c, out_channels), jnp.float32, -bound, bound),
            jax.random.uniform(kb, (1, out_channels), jnp.float32, -bound, bound),
        )
    return params


# ---------------------------------------------------------------------------
# One-time packing: fold W1-W2, split the final Linear per xs slice, pad to 128
# lanes, cast MXU operands to bf16 (biases stay f32 for the VPU epilogue).
# ---------------------------------------------------------------------------

def pack_params(params, in_channels, out_channels, num_layers, *, cat=True, lin=True,
                mxu_dtype=jnp.bfloat16):
    P = _round_up(max(in_channels, out_channels, 1), LANE)
    widths = [in_channels] + [out_channels] * num_layers
    packed = {"P": P, "cat": cat, "lin": lin, "widths": widths,
              "mxu_dtype": mxu_dtype, "convs": []}
    c = in_channels
    for (w, b) in params["convs"]:
        w1, w2 = w[:c, :], w[c:, :]
        wd = w1 - w2                                   # hoisted out of the hot path
        packed["convs"].append((
            _pad2(wd, P, P).astype(mxu_dtype),
            _pad2(w2, P, P).astype(mxu_dtype),
            _pad2(b, 1, P).astype(jnp.float32),
        ))
        c = w.shape[1]
    if lin:
        wf, bf = params["final"]
        sizes = widths if cat else [widths[-1]]
        offs = np.cumsum([0] + sizes)
        wf_parts = tuple(
            _pad2(wf[int(offs[k]):int(offs[k + 1]), :], P, P).astype(mxu_dtype)
            for k in range(len(sizes)))
        packed["final"] = (wf_parts, _pad2(bf, 1, P).astype(jnp.float32))
        packed["final_out"] = wf.shape[1]
    return packed


# ---------------------------------------------------------------------------
# Forward pass: adjacency construction is cheap O(E) XLA glue; everything else
# (all layers, concat, final Linear) runs inside one Pallas kernel in VMEM.
# ---------------------------------------------------------------------------

def edge_gnn_forward(packed, x, edge_index, *, dropout=0.0):
    N, C = x.shape
    P = packed["P"]
    cat, lin = packed["cat"], packed["lin"]
    num_layers = len(packed["convs"])
    mxu_dtype = packed["mxu_dtype"]
    Np = _round_up(max(N, 8), 8)

    src = edge_index[0]   # x_j
    tgt = edge_index[1]   # x_i (aggregation target)

    # In-adjacency COUNT matrix (integer-valued -> exact in bf16); the 1/deg mean
    # normalization and the deg>0 mask are applied in f32 inside the kernel.
    adj_cnt = jnp.zeros((Np, Np), jnp.float32).at[tgt, src].add(1.0)
    deg = adj_cnt.sum(axis=1, keepdims=True)
    inv_deg = 1.0 / jnp.maximum(deg, 1.0)
    mask = (deg > 0).astype(jnp.float32)

    x_p = jnp.pad(x, ((0, Np - N), (0, P - C)))        # lane-pad channels to 128

    args = [x_p, adj_cnt.astype(mxu_dtype), inv_deg, mask]
    for wd, w2, b in packed["convs"]:
        args += [wd, w2, b]
    if lin:
        wf_parts, bf = packed["final"]
        args += list(wf_parts) + [bf]

    out_cols = P if (lin or not cat) else (num_layers + 1) * P

    n_final = (num_layers + 1) if cat else 1
    flops = num_layers * (2 * 2 * Np * P * P + 2 * Np * Np * P)
    if lin:
        flops += n_final * 2 * Np * P * P
    bytes_accessed = sum(int(np.prod(a.shape)) * a.dtype.itemsize for a in args)
    bytes_accessed += Np * out_cols * 4

    out = pl.pallas_call(
        make_fused_kernel(num_layers, cat, lin, P),
        out_shape=jax.ShapeDtypeStruct((Np, out_cols), jnp.float32),
        in_specs=[_full_spec(a.shape) for a in args],
        out_specs=_full_spec((Np, out_cols)),
        cost_estimate=pl.CostEstimate(flops=flops, transcendentals=0,
                                      bytes_accessed=bytes_accessed),
    )(*args)

    # dropout: p=0.0 (and inference semantics) -> identity.
    # TODO(synk): add stateful (pltpu.prng_*) dropout masking for nonzero training-mode dropout.

    if lin:
        return out[:N, :packed["final_out"]]
    if cat:
        pieces = [out[:N, k * P:k * P + w] for k, w in enumerate(packed["widths"])]
        return jnp.concatenate(pieces, axis=-1)
    return out[:N, :packed["widths"][-1]]


# Pure-JAX reference (mirrors torch_geometric EdgeConv(aggr='mean') semantics).
def reference_forward(params, x, edge_index, cat=True, lin=True):
    N = x.shape[0]
    src, tgt = edge_index[0], edge_index[1]
    xs = [x]
    h = x
    for (w, b) in params["convs"]:
        xi, xj = h[tgt], h[src]
        feat = jnp.concatenate([xi, xj - xi], axis=-1)
        msgs = feat @ w + b
        summed = jnp.zeros((N, msgs.shape[1]), jnp.float32).at[tgt].add(msgs)
        cnt = jnp.zeros((N, 1), jnp.float32).at[tgt].add(1.0)
        h = jnp.maximum(summed / jnp.maximum(cnt, 1.0), 0.0)
        xs.append(h)
    out = jnp.concatenate(xs, axis=-1) if cat else xs[-1]
    if lin:
        w, b = params["final"]
        out = out @ w + b
    return out


if __name__ == "__main__":
    key = jax.random.PRNGKey(0)
    N, E = 32, 96
    in_channels, out_channels, num_layers = 8, 32, 2

    key, kx, ke, kp = jax.random.split(key, 4)
    x = jax.random.normal(kx, (N, in_channels), jnp.float32)
    edge_index = jax.random.randint(ke, (2, E), 0, N, jnp.int32)
    params = init_params(kp, in_channels, out_channels, num_layers)

    ref = reference_forward(params, x, edge_index)

    # 1) f32-MXU path: validates the fused kernel + adjacency reformulation exactly.
    packed32 = pack_params(params, in_channels, out_channels, num_layers,
                           mxu_dtype=jnp.float32)
    out32 = jax.block_until_ready(edge_gnn_forward(packed32, x, edge_index))
    np.testing.assert_allclose(np.asarray(out32), np.asarray(ref),
                               rtol=1e-4, atol=1e-4)

    # 2) bf16-MXU-input path (production config, f32 accumulation / f32 epilogue);
    #    tolerance loosened per review guidance for the bf16 cast of activations/weights.
    packed16 = pack_params(params, in_channels, out_channels, num_layers,
                           mxu_dtype=jnp.bfloat16)
    out16 = jax.block_until_ready(edge_gnn_forward(packed16, x, edge_index))
    assert out16.shape == (N, out_channels), out16.shape
    np.testing.assert_allclose(np.asarray(out16), np.asarray(ref),
                               rtol=5e-2, atol=5e-2)

    print("KERNEL_OK")
</pallas_src>

<mosaic_0001>
module attributes {stable_mosaic.version = 11 : i64} {
  func.func @kernel(%arg0: memref<32x128xf32, #tpu.memory_space<vmem>>, %arg1: memref<32x32xf32, #tpu.memory_space<vmem>>, %arg2: memref<32x1xf32, #tpu.memory_space<vmem>>, %arg3: memref<32x1xf32, #tpu.memory_space<vmem>>, %arg4: memref<128x128xf32, #tpu.memory_space<vmem>>, %arg5: memref<128x128xf32, #tpu.memory_space<vmem>>, %arg6: memref<1x128xf32, #tpu.memory_space<vmem>>, %arg7: memref<128x128xf32, #tpu.memory_space<vmem>>, %arg8: memref<128x128xf32, #tpu.memory_space<vmem>>, %arg9: memref<1x128xf32, #tpu.memory_space<vmem>>, %arg10: memref<128x128xf32, #tpu.memory_space<vmem>>, %arg11: memref<128x128xf32, #tpu.memory_space<vmem>>, %arg12: memref<128x128xf32, #tpu.memory_space<vmem>>, %arg13: memref<1x128xf32, #tpu.memory_space<vmem>>, %arg14: memref<32x128xf32, #tpu.memory_space<vmem>>) attributes {dimension_semantics = [], scalar_prefetch = 0 : i64, scratch_operands = 0 : i64, tpu.core_type = #tpu.core_type<tc>} {
    %c0 = arith.constant 0 : index
    %c0_0 = arith.constant 0 : index
    %0 = vector.load %arg1[%c0, %c0_0] : memref<32x32xf32, #tpu.memory_space<vmem>>, vector<32x32xf32>
    %c0_1 = arith.constant 0 : index
    %c0_2 = arith.constant 0 : index
    %1 = vector.load %arg2[%c0_1, %c0_2] : memref<32x1xf32, #tpu.memory_space<vmem>>, vector<32x1xf32>
    %c0_3 = arith.constant 0 : index
    %c0_4 = arith.constant 0 : index
    %2 = vector.load %arg3[%c0_3, %c0_4] : memref<32x1xf32, #tpu.memory_space<vmem>>, vector<32x1xf32>
    %c0_5 = arith.constant 0 : index
    %c0_6 = arith.constant 0 : index
    %3 = vector.load %arg0[%c0_5, %c0_6] : memref<32x128xf32, #tpu.memory_space<vmem>>, vector<32x128xf32>
    %c0_7 = arith.constant 0 : index
    %c0_8 = arith.constant 0 : index
    %4 = vector.load %arg4[%c0_7, %c0_8] : memref<128x128xf32, #tpu.memory_space<vmem>>, vector<128x128xf32>
    %cst = arith.constant dense<0.000000e+00> : vector<32x128xf32>
    %5 = tpu.matmul %3, %4, %cst {dimension_numbers = #tpu.dot_dimension_numbers<[1], [0], [0], [1], [0, 0, 1, 1], [], []>} : vector<32x128xf32>, vector<128x128xf32>, vector<32x128xf32> -> vector<32x128xf32>
    %c0_9 = arith.constant 0 : index
    %c0_10 = arith.constant 0 : index
    %6 = vector.load %arg5[%c0_9, %c0_10] : memref<128x128xf32, #tpu.memory_space<vmem>>, vector<128x128xf32>
    %cst_11 = arith.constant dense<0.000000e+00> : vector<32x128xf32>
    %7 = tpu.matmul %3, %6, %cst_11 {dimension_numbers = #tpu.dot_dimension_numbers<[1], [0], [0], [1], [0, 0, 1, 1], [], []>} : vector<32x128xf32>, vector<128x128xf32>, vector<32x128xf32> -> vector<32x128xf32>
    %cst_12 = arith.constant dense<0.000000e+00> : vector<32x128xf32>
    %8 = tpu.matmul %0, %7, %cst_12 {dimension_numbers = #tpu.dot_dimension_numbers<[1], [0], [0], [1], [0, 0, 1, 1], [], []>} : vector<32x32xf32>, vector<32x128xf32>, vector<32x128xf32> -> vector<32x128xf32>
    %c0_13 = arith.constant 0 : index
    %c0_14 = arith.constant 0 : index
    %9 = vector.load %arg6[%c0_13, %c0_14] : memref<1x128xf32, #tpu.memory_space<vmem>>, vector<1x128xf32>
    %10 = vector.broadcast %9 : vector<1x128xf32> to vector<32x128xf32>
    %11 = arith.addf %5, %10 : vector<32x128xf32>
    %12 = vector.broadcast %2 : vector<32x1xf32> to vector<32x128xf32>
    %13 = arith.mulf %12, %11 : vector<32x128xf32>
    %14 = vector.broadcast %1 : vector<32x1xf32> to vector<32x128xf32>
    %15 = arith.mulf %14, %8 : vector<32x128xf32>
    %16 = arith.addf %13, %15 : vector<32x128xf32>
    %cst_15 = arith.constant 0.000000e+00 : f32
    %17 = vector.broadcast %cst_15 : f32 to vector<32x128xf32>
    %18 = arith.maximumf %16, %17 : vector<32x128xf32>
    %c0_16 = arith.constant 0 : index
    %c0_17 = arith.constant 0 : index
    %19 = vector.load %arg7[%c0_16, %c0_17] : memref<128x128xf32, #tpu.memory_space<vmem>>, vector<128x128xf32>
    %cst_18 = arith.constant dense<0.000000e+00> : vector<32x128xf32>
    %20 = tpu.matmul %18, %19, %cst_18 {dimension_numbers = #tpu.dot_dimension_numbers<[1], [0], [0], [1], [0, 0, 1, 1], [], []>} : vector<32x128xf32>, vector<128x128xf32>, vector<32x128xf32> -> vector<32x128xf32>
    %c0_19 = arith.constant 0 : index
    %c0_20 = arith.constant 0 : index
    %21 = vector.load %arg8[%c0_19, %c0_20] : memref<128x128xf32, #tpu.memory_space<vmem>>, vector<128x128xf32>
    %cst_21 = arith.constant dense<0.000000e+00> : vector<32x128xf32>
    %22 = tpu.matmul %18, %21, %cst_21 {dimension_numbers = #tpu.dot_dimension_numbers<[1], [0], [0], [1], [0, 0, 1, 1], [], []>} : vector<32x128xf32>, vector<128x128xf32>, vector<32x128xf32> -> vector<32x128xf32>
    %cst_22 = arith.constant dense<0.000000e+00> : vector<32x128xf32>
    %23 = tpu.matmul %0, %22, %cst_22 {dimension_numbers = #tpu.dot_dimension_numbers<[1], [0], [0], [1], [0, 0, 1, 1], [], []>} : vector<32x32xf32>, vector<32x128xf32>, vector<32x128xf32> -> vector<32x128xf32>
    %c0_23 = arith.constant 0 : index
    %c0_24 = arith.constant 0 : index
    %24 = vector.load %arg9[%c0_23, %c0_24] : memref<1x128xf32, #tpu.memory_space<vmem>>, vector<1x128xf32>
    %25 = vector.broadcast %24 : vector<1x128xf32> to vector<32x128xf32>
    %26 = arith.addf %20, %25 : vector<32x128xf32>
    %27 = vector.broadcast %2 : vector<32x1xf32> to vector<32x128xf32>
    %28 = arith.mulf %27, %26 : vector<32x128xf32>
    %29 = vector.broadcast %1 : vector<32x1xf32> to vector<32x128xf32>
    %30 = arith.mulf %29, %23 : vector<32x128xf32>
    %31 = arith.addf %28, %30 : vector<32x128xf32>
    %cst_25 = arith.constant 0.000000e+00 : f32
    %32 = vector.broadcast %cst_25 : f32 to vector<32x128xf32>
    %33 = arith.maximumf %31, %32 : vector<32x128xf32>
    %c0_26 = arith.constant 0 : index
    %c0_27 = arith.constant 0 : index
    %34 = vector.load %arg13[%c0_26, %c0_27] : memref<1x128xf32, #tpu.memory_space<vmem>>, vector<1x128xf32>
    %c0_28 = arith.constant 0 : index
    %c0_29 = arith.constant 0 : index
    %35 = vector.load %arg10[%c0_28, %c0_29] : memref<128x128xf32, #tpu.memory_space<vmem>>, vector<128x128xf32>
    %cst_30 = arith.constant dense<0.000000e+00> : vector<32x128xf32>
    %36 = tpu.matmul %3, %35, %cst_30 {dimension_numbers = #tpu.dot_dimension_numbers<[1], [0], [0], [1], [0, 0, 1, 1], [], []>} : vector<32x128xf32>, vector<128x128xf32>, vector<32x128xf32> -> vector<32x128xf32>
    %37 = vector.broadcast %34 : vector<1x128xf32> to vector<32x128xf32>
    %38 = arith.addf %37, %36 : vector<32x128xf32>
    %c0_31 = arith.constant 0 : index
    %c0_32 = arith.constant 0 : index
    %39 = vector.load %arg11[%c0_31, %c0_32] : memref<128x128xf32, #tpu.memory_space<vmem>>, vector<128x128xf32>
    %cst_33 = arith.constant dense<0.000000e+00> : vector<32x128xf32>
    %40 = tpu.matmul %18, %39, %cst_33 {dimension_numbers = #tpu.dot_dimension_numbers<[1], [0], [0], [1], [0, 0, 1, 1], [], []>} : vector<32x128xf32>, vector<128x128xf32>, vector<32x128xf32> -> vector<32x128xf32>
    %41 = arith.addf %38, %40 : vector<32x128xf32>
    %c0_34 = arith.constant 0 : index
    %c0_35 = arith.constant 0 : index
    %42 = vector.load %arg12[%c0_34, %c0_35] : memref<128x128xf32, #tpu.memory_space<vmem>>, vector<128x128xf32>
    %cst_36 = arith.constant dense<0.000000e+00> : vector<32x128xf32>
    %43 = tpu.matmul %33, %42, %cst_36 {dimension_numbers = #tpu.dot_dimension_numbers<[1], [0], [0], [1], [0, 0, 1, 1], [], []>} : vector<32x128xf32>, vector<128x128xf32>, vector<32x128xf32> -> vector<32x128xf32>
    %44 = arith.addf %41, %43 : vector<32x128xf32>
    %c0_37 = arith.constant 0 : index
    %c0_38 = arith.constant 0 : index
    %45 = vector.load %arg14[%c0_37, %c0_38] : memref<32x128xf32, #tpu.memory_space<vmem>>, vector<32x128xf32>
    tpu.vector_store %arg14[%c0_37, %c0_38], %44 {strides = array<i32>} : memref<32x128xf32, #tpu.memory_space<vmem>>, vector<32x128xf32>,
    return
  }
}

</mosaic_0001>

<llo_original>
// kernel: tpu_custom_call.1
$region0: #{tpu_custom_call.1}
  #allocation0 [shape = 'u32[]', space=smem, size = 0x4, offset = 0x4, fixed_abs, tag = 'smem constant byte address 0x4 - core index']
  #allocation1 [shape = 'u32[144,128]{1,0:T(1,128)}', space=vmem, size = 0x12000, scoped, tag = 'internal scratch']
  %s0 = inlined_call_operand.vmem [shape: f32[32,128], index: 0, kind: input, shape index: {}]
  %s1 = inlined_call_operand.vmem [shape: f32[32,32], index: 1, kind: input, shape index: {}]
  %s2 = inlined_call_operand.vmem [shape: f32[32,1], index: 2, kind: input, shape index: {}]
  %s3 = inlined_call_operand.vmem [shape: f32[32,1], index: 3, kind: input, shape index: {}]
  %s4 = inlined_call_operand.hbm [shape: f32[128,128], index: 4, kind: input, shape index: {}]
  %s5 = inlined_call_operand.hbm [shape: f32[128,128], index: 5, kind: input, shape index: {}]
  %s6 = inlined_call_operand.vmem [shape: f32[1,128], index: 6, kind: input, shape index: {}]
  %s7 = inlined_call_operand.hbm [shape: f32[128,128], index: 7, kind: input, shape index: {}]
  %s8 = inlined_call_operand.hbm [shape: f32[128,128], index: 8, kind: input, shape index: {}]
  %s9 = inlined_call_operand.vmem [shape: f32[1,128], index: 9, kind: input, shape index: {}]
  %s10 = inlined_call_operand.hbm [shape: f32[128,128], index: 10, kind: input, shape index: {}]
  %s11 = inlined_call_operand.hbm [shape: f32[128,128], index: 11, kind: input, shape index: {}]
  %s12 = inlined_call_operand.hbm [shape: f32[128,128], index: 12, kind: input, shape index: {}]
  %s13 = inlined_call_operand.vmem [shape: f32[1,128], index: 13, kind: input, shape index: {}]
  %s14 = inlined_call_operand.hbm [shape: f32[32,128], index: 14, kind: output, shape index: {}]
  %s15 = sld [smem:[#allocation0]]
  $region94: #{tpu_custom_call.1} parent=0
    _
  %s17 = ssub.s32 1, %s15
  %s18 = scalar_select 0, %s17, %s15
  $region1: #{tpu_custom_call.1} parent=0
    #allocation2 [shape = 'u8[65536]{0}', space=vmem, size = 0x10000, scoped, tag = 'input window, operand 4, single buffered']
    #allocation3 [shape = 's32[1]{0}', space=sflag, size = 0x4, scoped, tag = 'scoped memory for tpu_custom_call.1']
    #allocation4 [shape = 's32[1]{0}', space=sflag, size = 0x4, scoped, tag = 'scoped memory for tpu_custom_call.1']
    #allocation5 [shape = 'u8[65536]{0}', space=vmem, size = 0x10000, scoped, tag = 'input window, operand 5, single buffered']
    #allocation6 [shape = 's32[1]{0}', space=sflag, size = 0x4, scoped, tag = 'scoped memory for tpu_custom_call.1']
    #allocation7 [shape = 'u8[65536]{0}', space=vmem, size = 0x10000, scoped, tag = 'input window, operand 7, single buffered']
    #allocation8 [shape = 'u8[65536]{0}', space=vmem, size = 0x10000, scoped, tag = 'input window, operand 8, single buffered']
    #allocation9 [shape = 's32[1]{0}', space=sflag, size = 0x4, scoped, tag = 'scoped memory for tpu_custom_call.1']
    #allocation10 [shape = 'u8[65536]{0}', space=vmem, size = 0x10000, scoped, tag = 'input window, operand 10, single buffered']
    #allocation11 [shape = 'u8[65536]{0}', space=vmem, size = 0x10000, scoped, tag = 'input window, operand 11, single buffered']
    #allocation12 [shape = 's32[1]{0}', space=sflag, size = 0x4, scoped, tag = 'scoped memory for tpu_custom_call.1']
    #allocation13 [shape = 'u8[65536]{0}', space=vmem, size = 0x10000, scoped, tag = 'input window, operand 12, single buffered']
    #allocation14 [shape = 'u8[16384]{0}', space=vmem, size = 0x4000, scoped, tag = 'output window, operand 0, single buffered']
    %19 = vsyncpa [#allocation3], 0
    %20 = vsyncpa [#allocation6], 0
    %21 = vsyncpa [#allocation9], 0
    %22 = vsyncpa [#allocation12], 0
    %23 = vsyncpa [#allocation4], 0
    // Predicated region
    $region2: #{tpu_custom_call.1} parent=1 // pred_check
      _
    $region3: #{tpu_custom_call.1} parent=1 // pred_check_branch
      %25 = sbr.rel (0) target = $region5
    $region4: #{tpu_custom_call.1} parent=1 // pred_region
      _
    $region5: #{tpu_custom_call.1} parent=1 // pred_fallthru
      _
    // Predicated region
    $region6: #{tpu_custom_call.1} parent=1 // pred_check
      _
    $region7: #{tpu_custom_call.1} parent=1 // pred_check_branch
      %27 = sbr.rel (0) target = $region9
    $region8: #{tpu_custom_call.1} parent=1 // pred_region
      _
    $region9: #{tpu_custom_call.1} parent=1 // pred_fallthru
      _
    // Predicated region
    $region10: #{tpu_custom_call.1} parent=1 // pred_check
      _
    $region11: #{tpu_custom_call.1} parent=1 // pred_check_branch
      %29 = sbr.rel (0) target = $region13
    $region12: #{tpu_custom_call.1} parent=1 // pred_region
      _
    $region13: #{tpu_custom_call.1} parent=1 // pred_fallthru
      _
    // Predicated region
    $region14: #{tpu_custom_call.1} parent=1 // pred_check
      _
    $region15: #{tpu_custom_call.1} parent=1 // pred_check_branch
      %31 = sbr.rel (0) target = $region17
    $region16: #{tpu_custom_call.1} parent=1 // pred_region
      _
    $region17: #{tpu_custom_call.1} parent=1 // pred_fallthru
      _
    // Predicated region
    $region18: #{tpu_custom_call.1} parent=1 // pred_check
      _
    $region19: #{tpu_custom_call.1} parent=1 // pred_check_branch
      %33 = sbr.rel (0) target = $region21
    $region20: #{tpu_custom_call.1} parent=1 // pred_region
      %s35 = ssub.s32 2048, 2048
      %36 = vsyncadd [#allocation3], %s35
      %s37 = sshll.u32 [#allocation2], 4
      %s38 = int_to_ptr.vmem [resolvable:$true] %s37
      %43 = dma.hbm_to_vmem [thread:$0]  %s4, 2048, %s38, [#allocation3], 128, 128, 8
    $region21: #{tpu_custom_call.1} parent=1 // pred_fallthru
      _
    // Predicated region
    $region22: #{tpu_custom_call.1} parent=1 // pred_check
      _
    $region23: #{tpu_custom_call.1} parent=1 // pred_check_branch
      %45 = sbr.rel (0) target = $region25
    $region24: #{tpu_custom_call.1} parent=1 // pred_region
      %s47 = ssub.s32 2048, 2048
      %48 = vsyncadd [#allocation6], %s47
      %s49 = sshll.u32 [#allocation5], 4
      %s50 = int_to_ptr.vmem [resolvable:$true] %s49
      %55 = dma.hbm_to_vmem [thread:$0]  %s5, 2048, %s50, [#allocation6], 128, 128, 8
    $region25: #{tpu_custom_call.1} parent=1 // pred_fallthru
      _
    // Predicated region
    $region26: #{tpu_custom_call.1} parent=1 // pred_check
      _
    $region27: #{tpu_custom_call.1} parent=1 // pred_check_branch
      %57 = sbr.rel (0) target = $region29
    $region28: #{tpu_custom_call.1} parent=1 // pred_region
      _
    $region29: #{tpu_custom_call.1} parent=1 // pred_fallthru
      _
    // Predicated region
    $region30: #{tpu_custom_call.1} parent=1 // pred_check
      _
    $region31: #{tpu_custom_call.1} parent=1 // pred_check_branch
      %59 = sbr.rel (0) target = $region33
    $region32: #{tpu_custom_call.1} parent=1 // pred_region
      %s61 = ssub.s32 2048, 2048
      %62 = vsyncadd [#allocation6], %s61
      %s63 = sshll.u32 [#allocation7], 4
      %s64 = int_to_ptr.vmem [resolvable:$true] %s63
      %69 = dma.hbm_to_vmem [thread:$0]  %s7, 2048, %s64, [#allocation6], 128, 128, 8
    $region33: #{tpu_custom_call.1} parent=1 // pred_fallthru
      _
    // Predicated region
    $region34: #{tpu_custom_call.1} parent=1 // pred_check
      _
    $region35: #{tpu_custom_call.1} parent=1 // pred_check_branch
      %71 = sbr.rel (0) target = $region37
    $region36: #{tpu_custom_call.1} parent=1 // pred_region
      %s73 = ssub.s32 2048, 2048
      %74 = vsyncadd [#allocation9], %s73
      %s75 = sshll.u32 [#allocation8], 4
      %s76 = int_to_ptr.vmem [resolvable:$true] %s75
      %81 = dma.hbm_to_vmem [thread:$0]  %s8, 2048, %s76, [#allocation9], 128, 128, 8
    $region37: #{tpu_custom_call.1} parent=1 // pred_fallthru
      _
    // Predicated region
    $region38: #{tpu_custom_call.1} parent=1 // pred_check
      _
    $region39: #{tpu_custom_call.1} parent=1 // pred_check_branch
      %83 = sbr.rel (0) target = $region41
    $region40: #{tpu_custom_call.1} parent=1 // pred_region
      _
    $region41: #{tpu_custom_call.1} parent=1 // pred_fallthru
      _
    // Predicated region
    $region42: #{tpu_custom_call.1} parent=1 // pred_check
      _
    $region43: #{tpu_custom_call.1} parent=1 // pred_check_branch
      %85 = sbr.rel (0) target = $region45
    $region44: #{tpu_custom_call.1} parent=1 // pred_region
      %s87 = ssub.s32 2048, 2048
      %88 = vsyncadd [#allocation9], %s87
      %s89 = sshll.u32 [#allocation10], 4
      %s90 = int_to_ptr.vmem [resolvable:$true] %s89
      %95 = dma.hbm_to_vmem [thread:$0]  %s10, 2048, %s90, [#allocation9], 128, 128, 8
    $region45: #{tpu_custom_call.1} parent=1 // pred_fallthru
      _
    // Predicated region
    $region46: #{tpu_custom_call.1} parent=1 // pred_check
      _
    $region47: #{tpu_custom_call.1} parent=1 // pred_check_branch
      %97 = sbr.rel (0) target = $region49
    $region48: #{tpu_custom_call.1} parent=1 // pred_region
      %s99 = ssub.s32 2048, 2048
      %100 = vsyncadd [#allocation12], %s99
      %s101 = sshll.u32 [#allocation11], 4
      %s102 = int_to_ptr.vmem [resolvable:$true] %s101
      %107 = dma.hbm_to_vmem [thread:$0]  %s11, 2048, %s102, [#allocation12], 128, 128, 8
    $region49: #{tpu_custom_call.1} parent=1 // pred_fallthru
      _
    // Predicated region
    $region50: #{tpu_custom_call.1} parent=1 // pred_check
      _
    $region51: #{tpu_custom_call.1} parent=1 // pred_check_branch
      %109 = sbr.rel (0) target = $region53
    $region52: #{tpu_custom_call.1} parent=1 // pred_region
      %s111 = ssub.s32 2048, 2048
      %112 = vsyncadd [#allocation12], %s111
      %s113 = sshll.u32 [#allocation13], 4
      %s114 = int_to_ptr.vmem [resolvable:$true] %s113
      %119 = dma.hbm_to_vmem [thread:$0]  %s12, 2048, %s114, [#allocation12], 128, 128, 8
    $region53: #{tpu_custom_call.1} parent=1 // pred_fallthru
      _
    // Predicated region
    $region54: #{tpu_custom_call.1} parent=1 // pred_check
      _
    $region55: #{tpu_custom_call.1} parent=1 // pred_check_branch
      %121 = sbr.rel (0) target = $region57
    $region56: #{tpu_custom_call.1} parent=1 // pred_region
      _
    $region57: #{tpu_custom_call.1} parent=1 // pred_fallthru
      _
    // Predicated region
    $region58: #{tpu_custom_call.1} parent=1 // pred_check
      _
    $region59: #{tpu_custom_call.1} parent=1 // pred_check_branch
      %123 = sbr.rel (0) target = $region61
    $region60: #{tpu_custom_call.1} parent=1 // pred_region
      %124 = dma.done [#allocation3], 2048
    $region61: #{tpu_custom_call.1} parent=1 // pred_fallthru
      _
    // Predicated region
    $region62: #{tpu_custom_call.1} parent=1 // pred_check
      _
    $region63: #{tpu_custom_call.1} parent=1 // pred_check_branch
      %126 = sbr.rel (0) target = $region65
    $region64: #{tpu_custom_call.1} parent=1 // pred_region
      %127 = dma.done [#allocation6], 2048
    $region65: #{tpu_custom_call.1} parent=1 // pred_fallthru
      _
    // Predicated region
    $region66: #{tpu_custom_call.1} parent=1 // pred_check
      _
    $region67: #{tpu_custom_call.1} parent=1 // pred_check_branch
      %129 = sbr.rel (0) target = $region69
    $region68: #{tpu_custom_call.1} parent=1 // pred_region
      %130 = dma.done [#allocation6], 2048
    $region69: #{tpu_custom_call.1} parent=1 // pred_fallthru
      _
    // Predicated region
    $region70: #{tpu_custom_call.1} parent=1 // pred_check
      _
    $region71: #{tpu_custom_call.1} parent=1 // pred_check_branch
      %132 = sbr.rel (0) target = $region73
    $region72: #{tpu_custom_call.1} parent=1 // pred_region
      %133 = dma.done [#allocation9], 2048
    $region73: #{tpu_custom_call.1} parent=1 // pred_fallthru
      _
    // Predicated region
    $region74: #{tpu_custom_call.1} parent=1 // pred_check
      _
    $region75: #{tpu_custom_call.1} parent=1 // pred_check_branch
      %135 = sbr.rel (0) target = $region77
    $region76: #{tpu_custom_call.1} parent=1 // pred_region
      %136 = dma.done [#allocation9], 2048
    $region77: #{tpu_custom_call.1} parent=1 // pred_fallthru
      _
    // Predicated region
    $region78: #{tpu_custom_call.1} parent=1 // pred_check
      _
    $region79: #{tpu_custom_call.1} parent=1 // pred_check_branch
      %138 = sbr.rel (0) target = $region81
    $region80: #{tpu_custom_call.1} parent=1 // pred_region
      %139 = dma.done [#allocation12], 2048
    $region81: #{tpu_custom_call.1} parent=1 // pred_fallthru
      _
    // Predicated region
    $region82: #{tpu_custom_call.1} parent=1 // pred_check
      _
    $region83: #{tpu_custom_call.1} parent=1 // pred_check_branch
      %141 = sbr.rel (0) target = $region85
    $region84: #{tpu_custom_call.1} parent=1 // pred_region
      %142 = dma.done [#allocation12], 2048
    $region85: #{tpu_custom_call.1} parent=1 // pred_fallthru
      _
    %v143 = vld [vmem:[%s1] sm:$0xff]
    %v144 = vld [vmem:[%s1 + $0x8] sm:$0xff]
    %v145 = vld [vmem:[%s1 + $0x10] sm:$0xff]
    %v146 = vld [vmem:[%s1 + $0x18] sm:$0xff]
    %v147 = vld [vmem:[%s2] sm:$0xff]
    %v148 = vld [vmem:[%s2 + $0x8] sm:$0xff]
    %v149 = vld [vmem:[%s2 + $0x10] sm:$0xff]
    %v150 = vld [vmem:[%s2 + $0x18] sm:$0xff]
    %v151 = vld [vmem:[%s3] sm:$0xff]
    %v152 = vld [vmem:[%s3 + $0x8] sm:$0xff]
    %v153 = vld [vmem:[%s3 + $0x10] sm:$0xff]
    %v154 = vld [vmem:[%s3 + $0x18] sm:$0xff]
    %v155 = vld [vmem:[%s0] sm:$0xff]
    %v156 = vld [vmem:[%s0 + $0x8] sm:$0xff]
    %v157 = vld [vmem:[%s0 + $0x10] sm:$0xff]
    %v158 = vld [vmem:[%s0 + $0x18] sm:$0xff]
    %v159 = vld [vmem:[#allocation2] sm:$0xff]
    %v160 = vld [vmem:[#allocation2 + $0x8] sm:$0xff]
    %v161 = vld [vmem:[#allocation2 + $0x10] sm:$0xff]
    %v162 = vld [vmem:[#allocation2 + $0x18] sm:$0xff]
    %v163 = vld [vmem:[#allocation2 + $0x20] sm:$0xff]
    %v164 = vld [vmem:[#allocation2 + $0x28] sm:$0xff]
    %v165 = vld [vmem:[#allocation2 + $0x30] sm:$0xff]
    %v166 = vld [vmem:[#allocation2 + $0x38] sm:$0xff]
    %v167 = vld [vmem:[#allocation2 + $0x40] sm:$0xff]
    %v168 = vld [vmem:[#allocation2 + $0x48] sm:$0xff]
    %v169 = vld [vmem:[#allocation2 + $0x50] sm:$0xff]
    %v170 = vld [vmem:[#allocation2 + $0x58] sm:$0xff]
    %v171 = vld [vmem:[#allocation2 + $0x60] sm:$0xff]
    %v172 = vld [vmem:[#allocation2 + $0x68] sm:$0xff]
    %v173 = vld [vmem:[#allocation2 + $0x70] sm:$0xff]
    %v174 = vld [vmem:[#allocation2 + $0x78] sm:$0xff]
    %v175 = vld [vmem:[#allocation5] sm:$0xff]
    %v176 = vld [vmem:[#allocation5 + $0x8] sm:$0xff]
    %v177 = vld [vmem:[#allocation5 + $0x10] sm:$0xff]
    %v178 = vld [vmem:[#allocation5 + $0x18] sm:$0xff]
    %v179 = vld [vmem:[#allocation5 + $0x20] sm:$0xff]
    %v180 = vld [vmem:[#allocation5 + $0x28] sm:$0xff]
    %v181 = vld [vmem:[#allocation5 + $0x30] sm:$0xff]
    %v182 = vld [vmem:[#allocation5 + $0x38] sm:$0xff]
    %v183 = vld [vmem:[#allocation5 + $0x40] sm:$0xff]
    %v184 = vld [vmem:[#allocation5 + $0x48] sm:$0xff]
    %v185 = vld [vmem:[#allocation5 + $0x50] sm:$0xff]
    %v186 = vld [vmem:[#allocation5 + $0x58] sm:$0xff]
    %v187 = vld [vmem:[#allocation5 + $0x60] sm:$0xff]
    %v188 = vld [vmem:[#allocation5 + $0x68] sm:$0xff]
    %v189 = vld [vmem:[#allocation5 + $0x70] sm:$0xff]
    %v190 = vld [vmem:[#allocation5 + $0x78] sm:$0xff]
    %191 = vmatprep.subr.mxu0 0.0
    %192 = vmatpush1.msra.mxu0 %v190
    %193 = vmatprep.subr.mxu0 0.0
    %194 = vmatpush1.msra.mxu0 %v189
    %195 = vmatprep.subr.mxu0 0.0
    %196 = vmatpush1.msra.mxu0 %v188
    %197 = vmatprep.subr.mxu0 0.0
    %198 = vmatpush1.msra.mxu0 %v187
    %199 = vmatprep.subr.mxu0 0.0
    %200 = vmatpush1.msra.mxu0 %v186
    %201 = vmatprep.subr.mxu0 0.0
    %202 = vmatpush1.msra.mxu0 %v185
    %203 = vmatprep.subr.mxu0 0.0
    %204 = vmatpush1.msra.mxu0 %v184
    %205 = vmatprep.subr.mxu0 0.0
    %206 = vmatpush1.msra.mxu0 %v183
    %207 = vmatprep.subr.mxu0 0.0
    %208 = vmatpush1.msra.mxu0 %v182
    %209 = vmatprep.subr.mxu0 0.0
    %210 = vmatpush1.msra.mxu0 %v181
    %211 = vmatprep.subr.mxu0 0.0
    %212 = vmatpush1.msra.mxu0 %v180
    %213 = vmatprep.subr.mxu0 0.0
    %214 = vmatpush1.msra.mxu0 %v179
    %215 = vmatprep.subr.mxu0 0.0
    %216 = vmatpush1.msra.mxu0 %v178
    %217 = vmatprep.subr.mxu0 0.0
    %218 = vmatpush1.msra.mxu0 %v177
    %219 = vmatprep.subr.mxu0 0.0
    %220 = vmatpush1.msra.mxu0 %v176
    %221 = vmatprep.subr.mxu0 0.0
    %222 = vmatpush1.msra.mxu0 %v175
    %223 = vmatprep.subr.mxu0 0.0
    %224 = vmatpush2.msra.mxu0 0.0
    %225 = vmatprep.subr.mxu0 0.0
    %226 = vmatpush2.msra.mxu0 0.0
    %227 = vmatprep.subr.mxu0 0.0
    %228 = vmatpush2.msra.mxu0 0.0
    %229 = vmatprep.subr.mxu0 0.0
    %230 = vmatpush2.msra.mxu0 0.0
    %231 = vmatprep.subr.mxu0 0.0
    %232 = vmatpush2.msra.mxu0 0.0
    %233 = vmatprep.subr.mxu0 0.0
    %234 = vmatpush2.msra.mxu0 0.0
    %235 = vmatprep.subr.mxu0 0.0
    %236 = vmatpush2.msra.mxu0 0.0
    %237 = vmatprep.subr.mxu0 0.0
    %238 = vmatpush2.msra.mxu0 0.0
    %239 = vmatprep.subr.mxu0 0.0
    %240 = vmatpush2.msra.mxu0 0.0
    %241 = vmatprep.subr.mxu0 0.0
    %242 = vmatpush2.msra.mxu0 0.0
    %243 = vmatprep.subr.mxu0 0.0
    %244 = vmatpush2.msra.mxu0 0.0
    %245 = vmatprep.subr.mxu0 0.0
    %246 = vmatpush2.msra.mxu0 0.0
    %247 = vmatprep.subr.mxu0 0.0
    %248 = vmatpush2.msra.mxu0 0.0
    %249 = vmatprep.subr.mxu0 0.0
    %250 = vmatpush2.msra.mxu0 0.0
    %251 = vmatprep.subr.mxu0 0.0
    %252 = vmatpush2.msra.mxu0 0.0
    %253 = vmatprep.subr.mxu0 0.0
    %254 = vmatpush2.msra.mxu0 0.0
    %255 = vmatprep.mubr.f32.mxu0 0.0
    %256 = vmatmul.mubr.f32.gmra.mxu0 %v155
    %v257 = vpop.f32.mrf.mxu0
    %v258 = vadd.f32 0.0, %v257
    %v259 = vpop.f32.mrf.mxu0
    %260 = vmatprep.mubr.f32.mxu0 0.0
    %261 = vmatmul.mubr.f32.gmra.mxu0 %v156
    %v262 = vpop.f32.mrf.mxu0
    %v263 = vadd.f32 0.0, %v262
    %v264 = vpop.f32.mrf.mxu0
    %265 = vmatprep.mubr.f32.mxu0 0.0
    %266 = vmatmul.mubr.f32.gmra.mxu0 %v157
    %v267 = vpop.f32.mrf.mxu0
    %v268 = vadd.f32 0.0, %v267
    %v269 = vpop.f32.mrf.mxu0
    %270 = vmatprep.mubr.f32.mxu0 0.0
    %271 = vmatmul.mubr.f32.gmra.mxu0 %v158
    %v272 = vpop.f32.mrf.mxu0
    %v273 = vadd.f32 0.0, %v272
    %v274 = vpop.f32.mrf.mxu0
    %275 = vdwg.mxu0
    %vm276 = vcmask 261120
    %v278 = vsel %vm276, %v143, 0
    %v281 = vsel %vm276, %v144, 0
    %v284 = vsel %vm276, %v145, 0
    %v287 = vsel %vm276, %v146, 0
    %289 = vmatprep.subr.mxu0 0.0
    %290 = vmatpush1.msra.mxu0 0.0
    %291 = vmatprep.subr.mxu0 0.0
    %292 = vmatpush1.msra.mxu0 0.0
    %293 = vmatprep.subr.mxu0 0.0
    %294 = vmatpush1.msra.mxu0 0.0
    %295 = vmatprep.subr.mxu0 0.0
    %296 = vmatpush1.msra.mxu0 0.0
    %297 = vmatprep.subr.mxu0 0.0
    %298 = vmatpush1.msra.mxu0 0.0
    %299 = vmatprep.subr.mxu0 0.0
    %300 = vmatpush1.msra.mxu0 0.0
    %301 = vmatprep.subr.mxu0 0.0
    %302 = vmatpush1.msra.mxu0 0.0
    %303 = vmatprep.subr.mxu0 0.0
    %304 = vmatpush1.msra.mxu0 0.0
    %305 = vmatprep.subr.mxu0 0.0
    %306 = vmatpush1.msra.mxu0 0.0
    %307 = vmatprep.subr.mxu0 0.0
    %308 = vmatpush1.msra.mxu0 0.0
    %309 = vmatprep.subr.mxu0 0.0
    %310 = vmatpush1.msra.mxu0 0.0
    %311 = vmatprep.subr.mxu0 0.0
    %312 = vmatpush1.msra.mxu0 0.0
    %313 = vmatprep.subr.mxu0 0.0
    %314 = vmatpush1.msra.mxu0 %v273
    %315 = vmatprep.subr.mxu0 0.0
    %316 = vmatpush1.msra.mxu0 %v268
    %317 = vmatprep.subr.mxu0 0.0
    %318 = vmatpush1.msra.mxu0 %v263
    %319 = vmatprep.subr.mxu0 0.0
    %320 = vmatpush1.msra.mxu0 %v258
    %321 = vmatprep.subr.mxu0 0.0
    %322 = vmatpush2.msra.mxu0 0.0
    %323 = vmatprep.subr.mxu0 0.0
    %324 = vmatpush2.msra.mxu0 0.0
    %325 = vmatprep.subr.mxu0 0.0
    %326 = vmatpush2.msra.mxu0 0.0
    %327 = vmatprep.subr.mxu0 0.0
    %328 = vmatpush2.msra.mxu0 0.0
    %329 = vmatprep.subr.mxu0 0.0
    %330 = vmatpush2.msra.mxu0 0.0
    %331 = vmatprep.subr.mxu0 0.0
    %332 = vmatpush2.msra.mxu0 0.0
    %333 = vmatprep.subr.mxu0 0.0
    %334 = vmatpush2.msra.mxu0 0.0
    %335 = vmatprep.subr.mxu0 0.0
    %336 = vmatpush2.msra.mxu0 0.0
    %337 = vmatprep.subr.mxu0 0.0
    %338 = vmatpush2.msra.mxu0 0.0
    %339 = vmatprep.subr.mxu0 0.0
    %340 = vmatpush2.msra.mxu0 0.0
    %341 = vmatprep.subr.mxu0 0.0
    %342 = vmatpush2.msra.mxu0 0.0
    %343 = vmatprep.subr.mxu0 0.0
    %344 = vmatpush2.msra.mxu0 0.0
    %345 = vmatprep.subr.mxu0 0.0
    %346 = vmatpush2.msra.mxu0 0.0
    %347 = vmatprep.subr.mxu0 0.0
    %348 = vmatpush2.msra.mxu0 0.0
    %349 = vmatprep.subr.mxu0 0.0
    %350 = vmatpush2.msra.mxu0 0.0
    %351 = vmatprep.subr.mxu0 0.0
    %352 = vmatpush2.msra.mxu0 0.0
    %353 = vmatprep.mubr.f32.mxu0 0.0
    %354 = vmatmul.mubr.f32.gmra.mxu0 %v278
    %v355 = vpop.f32.mrf.mxu0
    %v356 = vadd.f32 0.0, %v355
    %v357 = vpop.f32.mrf.mxu0
    %358 = vmatprep.mubr.f32.mxu0 0.0
    %359 = vmatmul.mubr.f32.gmra.mxu0 %v281
    %v360 = vpop.f32.mrf.mxu0
    %v361 = vadd.f32 0.0, %v360
    %v362 = vpop.f32.mrf.mxu0
    %363 = vmatprep.mubr.f32.mxu0 0.0
    %364 = vmatmul.mubr.f32.gmra.mxu0 %v284
    %v365 = vpop.f32.mrf.mxu0
    %v366 = vadd.f32 0.0, %v365
    %v367 = vpop.f32.mrf.mxu0
    %368 = vmatprep.mubr.f32.mxu0 0.0
    %369 = vmatmul.mubr.f32.gmra.mxu0 %v287
    %v370 = vpop.f32.mrf.mxu0
    %v371 = vadd.f32 0.0, %v370
    %v372 = vpop.f32.mrf.mxu0
    %373 = vdwg.mxu0
    %v374 = vld [vmem:[%s6] sm:$0x1]
    %v376 = vlaneseq
    %v377 = vshrl.u32 %v376, 7
    %v378 = vsub.s32 0, %v377
    %v379 = vrot.slane %v374, %v378
    %381 = vmatprep.subr.mxu0 0.0
    %382 = vmatpush1.msra.mxu0 %v174
    %383 = vmatprep.subr.mxu0 0.0
    %384 = vmatpush1.msra.mxu0 %v173
    %385 = vmatprep.subr.mxu0 0.0
    %386 = vmatpush1.msra.mxu0 %v172
    %387 = vmatprep.subr.mxu0 0.0
    %388 = vmatpush1.msra.mxu0 %v171
    %389 = vmatprep.subr.mxu0 0.0
    %390 = vmatpush1.msra.mxu0 %v170
    %391 = vmatprep.subr.mxu0 0.0
    %392 = vmatpush1.msra.mxu0 %v169
    %393 = vmatprep.subr.mxu0 0.0
    %394 = vmatpush1.msra.mxu0 %v168
    %395 = vmatprep.subr.mxu0 0.0
    %396 = vmatpush1.msra.mxu0 %v167
    %397 = vmatprep.subr.mxu0 0.0
    %398 = vmatpush1.msra.mxu0 %v166
    %399 = vmatprep.subr.mxu0 0.0
    %400 = vmatpush1.msra.mxu0 %v165
    %401 = vmatprep.subr.mxu0 0.0
    %402 = vmatpush1.msra.mxu0 %v164
    %403 = vmatprep.subr.mxu0 0.0
    %404 = vmatpush1.msra.mxu0 %v163
    %405 = vmatprep.subr.mxu0 0.0
    %406 = vmatpush1.msra.mxu0 %v162
    %407 = vmatprep.subr.mxu0 0.0
    %408 = vmatpush1.msra.mxu0 %v161
    %409 = vmatprep.subr.mxu0 0.0
    %410 = vmatpush1.msra.mxu0 %v160
    %411 = vmatprep.subr.mxu0 0.0
    %412 = vmatpush1.msra.mxu0 %v159
    %413 = vmatprep.subr.mxu0 0.0
    %414 = vmatpush2.msra.mxu0 0.0
    %415 = vmatprep.subr.mxu0 0.0
    %416 = vmatpush2.msra.mxu0 0.0
    %417 = vmatprep.subr.mxu0 0.0
    %418 = vmatpush2.msra.mxu0 0.0
    %419 = vmatprep.subr.mxu0 0.0
    %420 = vmatpush2.msra.mxu0 0.0
    %421 = vmatprep.subr.mxu0 0.0
    %422 = vmatpush2.msra.mxu0 0.0
    %423 = vmatprep.subr.mxu0 0.0
    %424 = vmatpush2.msra.mxu0 0.0
    %425 = vmatprep.subr.mxu0 0.0
    %426 = vmatpush2.msra.mxu0 0.0
    %427 = vmatprep.subr.mxu0 0.0
    %428 = vmatpush2.msra.mxu0 0.0
    %429 = vmatprep.subr.mxu0 0.0
    %430 = vmatpush2.msra.mxu0 0.0
    %431 = vmatprep.subr.mxu0 0.0
    %432 = vmatpush2.msra.mxu0 0.0
    %433 = vmatprep.subr.mxu0 0.0
    %434 = vmatpush2.msra.mxu0 0.0
    %435 = vmatprep.subr.mxu0 0.0
    %436 = vmatpush2.msra.mxu0 0.0
    %437 = vmatprep.subr.mxu0 0.0
    %438 = vmatpush2.msra.mxu0 0.0
    %439 = vmatprep.subr.mxu0 0.0
    %440 = vmatpush2.msra.mxu0 0.0
    %441 = vmatprep.subr.mxu0 0.0
    %442 = vmatpush2.msra.mxu0 0.0
    %443 = vmatprep.subr.mxu0 0.0
    %444 = vmatpush2.msra.mxu0 0.0
    %445 = vmatprep.mubr.f32.mxu0 0.0
    %446 = vmatmul.mubr.f32.gmra.mxu0 %v155
    %v447 = vpop.f32.mrf.mxu0
    %v448 = vadd.f32 %v379, %v447
    %v449 = vpop.f32.mrf.mxu0
    %450 = vmatprep.mubr.f32.mxu0 0.0
    %451 = vmatmul.mubr.f32.gmra.mxu0 %v156
    %v452 = vpop.f32.mrf.mxu0
    %v453 = vadd.f32 %v379, %v452
    %v454 = vpop.f32.mrf.mxu0
    %455 = vmatprep.mubr.f32.mxu0 0.0
    %456 = vmatmul.mubr.f32.gmra.mxu0 %v157
    %v457 = vpop.f32.mrf.mxu0
    %v458 = vadd.f32 %v379, %v457
    %v459 = vpop.f32.mrf.mxu0
    %460 = vmatprep.mubr.f32.mxu0 0.0
    %461 = vmatmul.mubr.f32.gmra.mxu0 %v158
    %v462 = vpop.f32.mrf.mxu0
    %v463 = vadd.f32 %v379, %v462
    %v464 = vpop.f32.mrf.mxu0
    %465 = vdwg.mxu0
    %467 = vset.pattern.permute.xlu0 0
    %468 = vperm.xlu0 %467, %v151
    %v469 = vpop.permute.xlu0 %468
    %472 = vset.pattern.permute.xlu0 0
    %473 = vperm.xlu0 %472, %v152
    %v474 = vpop.permute.xlu0 %473
    %477 = vset.pattern.permute.xlu0 0
    %478 = vperm.xlu0 %477, %v153
    %v479 = vpop.permute.xlu0 %478
    %482 = vset.pattern.permute.xlu0 0
    %483 = vperm.xlu0 %482, %v154
    %v484 = vpop.permute.xlu0 %483
    %v486 = vmul.f32 %v469, %v448
    %v487 = vmul.f32 %v474, %v453
    %v488 = vmul.f32 %v479, %v458
    %v489 = vmul.f32 %v484, %v463
    %491 = vset.pattern.permute.xlu0 0
    %492 = vperm.xlu0 %491, %v147
    %v493 = vpop.permute.xlu0 %492
    %496 = vset.pattern.permute.xlu0 0
    %497 = vperm.xlu0 %496, %v148
    %v498 = vpop.permute.xlu0 %497
    %501 = vset.pattern.permute.xlu0 0
    %502 = vperm.xlu0 %501, %v149
    %v503 = vpop.permute.xlu0 %502
    %506 = vset.pattern.permute.xlu0 0
    %507 = vperm.xlu0 %506, %v150
    %v508 = vpop.permute.xlu0 %507
    %v510 = vmul.f32 %v493, %v356
    %v511 = vmul.f32 %v498, %v361
    %v512 = vmul.f32 %v503, %v366
    %v513 = vmul.f32 %v508, %v371
    %v514 = vadd.f32 %v486, %v510
    %v515 = vadd.f32 %v487, %v511
    %v516 = vadd.f32 %v488, %v512
    %v517 = vadd.f32 %v489, %v513
    %v518 = vmax.f32 %v514, 0.0
    %v519 = vmax.f32 %v515, 0.0
    %v520 = vmax.f32 %v516, 0.0
    %v521 = vmax.f32 %v517, 0.0
    %v522 = vld [vmem:[#allocation7] sm:$0xff]
    %v523 = vld [vmem:[#allocation7 + $0x8] sm:$0xff]
    %v524 = vld [vmem:[#allocation7 + $0x10] sm:$0xff]
    %v525 = vld [vmem:[#allocation7 + $0x18] sm:$0xff]
    %v526 = vld [vmem:[#allocation7 + $0x20] sm:$0xff]
    %v527 = vld [vmem:[#allocation7 + $0x28] sm:$0xff]
    %v528 = vld [vmem:[#allocation7 + $0x30] sm:$0xff]
    %v529 = vld [vmem:[#allocation7 + $0x38] sm:$0xff]
    %v530 = vld [vmem:[#allocation7 + $0x40] sm:$0xff]
    %v531 = vld [vmem:[#allocation7 + $0x48] sm:$0xff]
    %v532 = vld [vmem:[#allocation7 + $0x50] sm:$0xff]
    %v533 = vld [vmem:[#allocation7 + $0x58] sm:$0xff]
    %v534 = vld [vmem:[#allocation7 + $0x60] sm:$0xff]
    %v535 = vld [vmem:[#allocation7 + $0x68] sm:$0xff]
    %v536 = vld [vmem:[#allocation7 + $0x70] sm:$0xff]
    %v537 = vld [vmem:[#allocation7 + $0x78] sm:$0xff]
    %v538 = vld [vmem:[#allocation8] sm:$0xff]
    %v539 = vld [vmem:[#allocation8 + $0x8] sm:$0xff]
    %v540 = vld [vmem:[#allocation8 + $0x10] sm:$0xff]
    %v541 = vld [vmem:[#allocation8 + $0x18] sm:$0xff]
    %v542 = vld [vmem:[#allocation8 + $0x20] sm:$0xff]
    %v543 = vld [vmem:[#allocation8 + $0x28] sm:$0xff]
    %v544 = vld [vmem:[#allocation8 + $0x30] sm:$0xff]
    %v545 = vld [vmem:[#allocation8 + $0x38] sm:$0xff]
    %v546 = vld [vmem:[#allocation8 + $0x40] sm:$0xff]
    %v547 = vld [vmem:[#allocation8 + $0x48] sm:$0xff]
    %v548 = vld [vmem:[#allocation8 + $0x50] sm:$0xff]
    %v549 = vld [vmem:[#allocation8 + $0x58] sm:$0xff]
    %v550 = vld [vmem:[#allocation8 + $0x60] sm:$0xff]
    %v551 = vld [vmem:[#allocation8 + $0x68] sm:$0xff]
    %v552 = vld [vmem:[#allocation8 + $0x70] sm:$0xff]
    %v553 = vld [vmem:[#allocation8 + $0x78] sm:$0xff]
    %554 = vmatprep.subr.mxu0 0.0
    %555 = vmatpush1.msra.mxu0 %v553
    %556 = vmatprep.subr.mxu0 0.0
    %557 = vmatpush1.msra.mxu0 %v552
    %558 = vmatprep.subr.mxu0 0.0
    %559 = vmatpush1.msra.mxu0 %v551
    %560 = vmatprep.subr.mxu0 0.0
    %561 = vmatpush1.msra.mxu0 %v550
    %562 = vmatprep.subr.mxu0 0.0
    %563 = vmatpush1.msra.mxu0 %v549
    %564 = vmatprep.subr.mxu0 0.0
    %565 = vmatpush1.msra.mxu0 %v548
    %566 = vmatprep.subr.mxu0 0.0
    %567 = vmatpush1.msra.mxu0 %v547
    %568 = vmatprep.subr.mxu0 0.0
    %569 = vmatpush1.msra.mxu0 %v546
    %570 = vmatprep.subr.mxu0 0.0
    %571 = vmatpush1.msra.mxu0 %v545
    %572 = vmatprep.subr.mxu0 0.0
    %573 = vmatpush1.msra.mxu0 %v544
    %574 = vmatprep.subr.mxu0 0.0
    %575 = vmatpush1.msra.mxu0 %v543
    %576 = vmatprep.subr.mxu0 0.0
    %577 = vmatpush1.msra.mxu0 %v542
    %578 = vmatprep.subr.mxu0 0.0
    %579 = vmatpush1.msra.mxu0 %v541
    %580 = vmatprep.subr.mxu0 0.0
    %581 = vmatpush1.msra.mxu0 %v540
    %582 = vmatprep.subr.mxu0 0.0
    %583 = vmatpush1.msra.mxu0 %v539
    %584 = vmatprep.subr.mxu0 0.0
    %585 = vmatpush1.msra.mxu0 %v538
    %586 = vmatprep.subr.mxu0 0.0
    %587 = vmatpush2.msra.mxu0 0.0
    %588 = vmatprep.subr.mxu0 0.0
    %589 = vmatpush2.msra.mxu0 0.0
    %590 = vmatprep.subr.mxu0 0.0
    %591 = vmatpush2.msra.mxu0 0.0
    %592 = vmatprep.subr.mxu0 0.0
    %593 = vmatpush2.msra.mxu0 0.0
    %594 = vmatprep.subr.mxu0 0.0
    %595 = vmatpush2.msra.mxu0 0.0
    %596 = vmatprep.subr.mxu0 0.0
    %597 = vmatpush2.msra.mxu0 0.0
    %598 = vmatprep.subr.mxu0 0.0
    %599 = vmatpush2.msra.mxu0 0.0
    %600 = vmatprep.subr.mxu0 0.0
    %601 = vmatpush2.msra.mxu0 0.0
    %602 = vmatprep.subr.mxu0 0.0
    %603 = vmatpush2.msra.mxu0 0.0
    %604 = vmatprep.subr.mxu0 0.0
    %605 = vmatpush2.msra.mxu0 0.0
    %606 = vmatprep.subr.mxu0 0.0
    %607 = vmatpush2.msra.mxu0 0.0
    %608 = vmatprep.subr.mxu0 0.0
    %609 = vmatpush2.msra.mxu0 0.0
    %610 = vmatprep.subr.mxu0 0.0
    %611 = vmatpush2.msra.mxu0 0.0
    %612 = vmatprep.subr.mxu0 0.0
    %613 = vmatpush2.msra.mxu0 0.0
    %614 = vmatprep.subr.mxu0 0.0
    %615 = vmatpush2.msra.mxu0 0.0
    %616 = vmatprep.subr.mxu0 0.0
    %617 = vmatpush2.msra.mxu0 0.0
    %618 = vmatprep.mubr.f32.mxu0 0.0
    %619 = vmatmul.mubr.f32.gmra.mxu0 %v518
    %v620 = vpop.f32.mrf.mxu0
    %v621 = vadd.f32 0.0, %v620
    %v622 = vpop.f32.mrf.mxu0
    %623 = vmatprep.mubr.f32.mxu0 0.0
    %624 = vmatmul.mubr.f32.gmra.mxu0 %v519
    %v625 = vpop.f32.mrf.mxu0
    %v626 = vadd.f32 0.0, %v625
    %v627 = vpop.f32.mrf.mxu0
    %628 = vmatprep.mubr.f32.mxu0 0.0
    %629 = vmatmul.mubr.f32.gmra.mxu0 %v520
    %v630 = vpop.f32.mrf.mxu0
    %v631 = vadd.f32 0.0, %v630
    %v632 = vpop.f32.mrf.mxu0
    %633 = vmatprep.mubr.f32.mxu0 0.0
    %634 = vmatmul.mubr.f32.gmra.mxu0 %v521
    %v635 = vpop.f32.mrf.mxu0
    %v636 = vadd.f32 0.0, %v635
    %v637 = vpop.f32.mrf.mxu0
    %638 = vdwg.mxu0
    %639 = vmatprep.subr.mxu0 0.0
    %640 = vmatpush1.msra.mxu0 0.0
    %641 = vmatprep.subr.mxu0 0.0
    %642 = vmatpush1.msra.mxu0 0.0
    %643 = vmatprep.subr.mxu0 0.0
    %644 = vmatpush1.msra.mxu0 0.0
    %645 = vmatprep.subr.mxu0 0.0
    %646 = vmatpush1.msra.mxu0 0.0
    %647 = vmatprep.subr.mxu0 0.0
    %648 = vmatpush1.msra.mxu0 0.0
    %649 = vmatprep.subr.mxu0 0.0
    %650 = vmatpush1.msra.mxu0 0.0
    %651 = vmatprep.subr.mxu0 0.0
    %652 = vmatpush1.msra.mxu0 0.0
    %653 = vmatprep.subr.mxu0 0.0
    %654 = vmatpush1.msra.mxu0 0.0
    %655 = vmatprep.subr.mxu0 0.0
    %656 = vmatpush1.msra.mxu0 0.0
    %657 = vmatprep.subr.mxu0 0.0
    %658 = vmatpush1.msra.mxu0 0.0
    %659 = vmatprep.subr.mxu0 0.0
    %660 = vmatpush1.msra.mxu0 0.0
    %661 = vmatprep.subr.mxu0 0.0
    %662 = vmatpush1.msra.mxu0 0.0
    %663 = vmatprep.subr.mxu0 0.0
    %664 = vmatpush1.msra.mxu0 %v636
    %665 = vmatprep.subr.mxu0 0.0
    %666 = vmatpush1.msra.mxu0 %v631
    %667 = vmatprep.subr.mxu0 0.0
    %668 = vmatpush1.msra.mxu0 %v626
    %669 = vmatprep.subr.mxu0 0.0
    %670 = vmatpush1.msra.mxu0 %v621
    %671 = vmatprep.subr.mxu0 0.0
    %672 = vmatpush2.msra.mxu0 0.0
    %673 = vmatprep.subr.mxu0 0.0
    %674 = vmatpush2.msra.mxu0 0.0
    %675 = vmatprep.subr.mxu0 0.0
    %676 = vmatpush2.msra.mxu0 0.0
    %677 = vmatprep.subr.mxu0 0.0
    %678 = vmatpush2.msra.mxu0 0.0
    %679 = vmatprep.subr.mxu0 0.0
    %680 = vmatpush2.msra.mxu0 0.0
    %681 = vmatprep.subr.mxu0 0.0
    %682 = vmatpush2.msra.mxu0 0.0
    %683 = vmatprep.subr.mxu0 0.0
    %684 = vmatpush2.msra.mxu0 0.0
    %685 = vmatprep.subr.mxu0 0.0
    %686 = vmatpush2.msra.mxu0 0.0
    %687 = vmatprep.subr.mxu0 0.0
    %688 = vmatpush2.msra.mxu0 0.0
    %689 = vmatprep.subr.mxu0 0.0
    %690 = vmatpush2.msra.mxu0 0.0
    %691 = vmatprep.subr.mxu0 0.0
    %692 = vmatpush2.msra.mxu0 0.0
    %693 = vmatprep.subr.mxu0 0.0
    %694 = vmatpush2.msra.mxu0 0.0
    %695 = vmatprep.subr.mxu0 0.0
    %696 = vmatpush2.msra.mxu0 0.0
    %697 = vmatprep.subr.mxu0 0.0
    %698 = vmatpush2.msra.mxu0 0.0
    %699 = vmatprep.subr.mxu0 0.0
    %700 = vmatpush2.msra.mxu0 0.0
    %701 = vmatprep.subr.mxu0 0.0
    %702 = vmatpush2.msra.mxu0 0.0
    %703 = vmatprep.mubr.f32.mxu0 0.0
    %704 = vmatmul.mubr.f32.gmra.mxu0 %v278
    %v705 = vpop.f32.mrf.mxu0
    %v706 = vadd.f32 0.0, %v705
    %v707 = vpop.f32.mrf.mxu0
    %708 = vmatprep.mubr.f32.mxu0 0.0
    %709 = vmatmul.mubr.f32.gmra.mxu0 %v281
    %v710 = vpop.f32.mrf.mxu0
    %v711 = vadd.f32 0.0, %v710
    %v712 = vpop.f32.mrf.mxu0
    %713 = vmatprep.mubr.f32.mxu0 0.0
    %714 = vmatmul.mubr.f32.gmra.mxu0 %v284
    %v715 = vpop.f32.mrf.mxu0
    %v716 = vadd.f32 0.0, %v715
    %v717 = vpop.f32.mrf.mxu0
    %718 = vmatprep.mubr.f32.mxu0 0.0
    %719 = vmatmul.mubr.f32.gmra.mxu0 %v287
    %v720 = vpop.f32.mrf.mxu0
    %v721 = vadd.f32 0.0, %v720
    %v722 = vpop.f32.mrf.mxu0
    %723 = vdwg.mxu0
    %v724 = vld [vmem:[%s9] sm:$0x1]
    %v726 = vlaneseq
    %v727 = vshrl.u32 %v726, 7
    %v728 = vsub.s32 0, %v727
    %v729 = vrot.slane %v724, %v728
    %731 = vmatprep.subr.mxu0 0.0
    %732 = vmatpush1.msra.mxu0 %v537
    %733 = vmatprep.subr.mxu0 0.0
    %734 = vmatpush1.msra.mxu0 %v536
    %735 = vmatprep.subr.mxu0 0.0
    %736 = vmatpush1.msra.mxu0 %v535
    %737 = vmatprep.subr.mxu0 0.0
    %738 = vmatpush1.msra.mxu0 %v534
    %739 = vmatprep.subr.mxu0 0.0
    %740 = vmatpush1.msra.mxu0 %v533
    %741 = vmatprep.subr.mxu0 0.0
    %742 = vmatpush1.msra.mxu0 %v532
    %743 = vmatprep.subr.mxu0 0.0
    %744 = vmatpush1.msra.mxu0 %v531
    %745 = vmatprep.subr.mxu0 0.0
    %746 = vmatpush1.msra.mxu0 %v530
    %747 = vmatprep.subr.mxu0 0.0
    %748 = vmatpush1.msra.mxu0 %v529
    %749 = vmatprep.subr.mxu0 0.0
    %750 = vmatpush1.msra.mxu0 %v528
    %751 = vmatprep.subr.mxu0 0.0
    %752 = vmatpush1.msra.mxu0 %v527
    %753 = vmatprep.subr.mxu0 0.0
    %754 = vmatpush1.msra.mxu0 %v526
    %755 = vmatprep.subr.mxu0 0.0
    %756 = vmatpush1.msra.mxu0 %v525
    %757 = vmatprep.subr.mxu0 0.0
    %758 = vmatpush1.msra.mxu0 %v524
    %759 = vmatprep.subr.mxu0 0.0
    %760 = vmatpush1.msra.mxu0 %v523
    %761 = vmatprep.subr.mxu0 0.0
    %762 = vmatpush1.msra.mxu0 %v522
    %763 = vmatprep.subr.mxu0 0.0
    %764 = vmatpush2.msra.mxu0 0.0
    %765 = vmatprep.subr.mxu0 0.0
    %766 = vmatpush2.msra.mxu0 0.0
    %767 = vmatprep.subr.mxu0 0.0
    %768 = vmatpush2.msra.mxu0 0.0
    %769 = vmatprep.subr.mxu0 0.0
    %770 = vmatpush2.msra.mxu0 0.0
    %771 = vmatprep.subr.mxu0 0.0
    %772 = vmatpush2.msra.mxu0 0.0
    %773 = vmatprep.subr.mxu0 0.0
    %774 = vmatpush2.msra.mxu0 0.0
    %775 = vmatprep.subr.mxu0 0.0
    %776 = vmatpush2.msra.mxu0 0.0
    %777 = vmatprep.subr.mxu0 0.0
    %778 = vmatpush2.msra.mxu0 0.0
    %779 = vmatprep.subr.mxu0 0.0
    %780 = vmatpush2.msra.mxu0 0.0
    %781 = vmatprep.subr.mxu0 0.0
    %782 = vmatpush2.msra.mxu0 0.0
    %783 = vmatprep.subr.mxu0 0.0
    %784 = vmatpush2.msra.mxu0 0.0
    %785 = vmatprep.subr.mxu0 0.0
    %786 = vmatpush2.msra.mxu0 0.0
    %787 = vmatprep.subr.mxu0 0.0
    %788 = vmatpush2.msra.mxu0 0.0
    %789 = vmatprep.subr.mxu0 0.0
    %790 = vmatpush2.msra.mxu0 0.0
    %791 = vmatprep.subr.mxu0 0.0
    %792 = vmatpush2.msra.mxu0 0.0
    %793 = vmatprep.subr.mxu0 0.0
    %794 = vmatpush2.msra.mxu0 0.0
    %795 = vmatprep.mubr.f32.mxu0 0.0
    %796 = vmatmul.mubr.f32.gmra.mxu0 %v518
    %v797 = vpop.f32.mrf.mxu0
    %v798 = vadd.f32 %v729, %v797
    %v799 = vpop.f32.mrf.mxu0
    %800 = vmatprep.mubr.f32.mxu0 0.0
    %801 = vmatmul.mubr.f32.gmra.mxu0 %v519
    %v802 = vpop.f32.mrf.mxu0
    %v803 = vadd.f32 %v729, %v802
    %v804 = vpop.f32.mrf.mxu0
    %805 = vmatprep.mubr.f32.mxu0 0.0
    %806 = vmatmul.mubr.f32.gmra.mxu0 %v520
    %v807 = vpop.f32.mrf.mxu0
    %v808 = vadd.f32 %v729, %v807
    %v809 = vpop.f32.mrf.mxu0
    %810 = vmatprep.mubr.f32.mxu0 0.0
    %811 = vmatmul.mubr.f32.gmra.mxu0 %v521
    %v812 = vpop.f32.mrf.mxu0
    %v813 = vadd.f32 %v729, %v812
    %v814 = vpop.f32.mrf.mxu0
    %815 = vdwg.mxu0
    %v816 = vmul.f32 %v469, %v798
    %v817 = vmul.f32 %v474, %v803
    %v818 = vmul.f32 %v479, %v808
    %v819 = vmul.f32 %v484, %v813
    %v820 = vmul.f32 %v493, %v706
    %v821 = vmul.f32 %v498, %v711
    %v822 = vmul.f32 %v503, %v716
    %v823 = vmul.f32 %v508, %v721
    %v824 = vadd.f32 %v816, %v820
    %v825 = vadd.f32 %v817, %v821
    %v826 = vadd.f32 %v818, %v822
    %v827 = vadd.f32 %v819, %v823
    %v828 = vmax.f32 %v824, 0.0
    %v829 = vmax.f32 %v825, 0.0
    %v830 = vmax.f32 %v826, 0.0
    %v831 = vmax.f32 %v827, 0.0
    %v832 = vld [vmem:[%s13] sm:$0x1]
    %v833 = vld [vmem:[#allocation10] sm:$0xff]
    %v834 = vld [vmem:[#allocation10 + $0x8] sm:$0xff]
    %v835 = vld [vmem:[#allocation10 + $0x10] sm:$0xff]
    %v836 = vld [vmem:[#allocation10 + $0x18] sm:$0xff]
    %v837 = vld [vmem:[#allocation10 + $0x20] sm:$0xff]
    %v838 = vld [vmem:[#allocation10 + $0x28] sm:$0xff]
    %v839 = vld [vmem:[#allocation10 + $0x30] sm:$0xff]
    %v840 = vld [vmem:[#allocation10 + $0x38] sm:$0xff]
    %v841 = vld [vmem:[#allocation10 + $0x40] sm:$0xff]
    %v842 = vld [vmem:[#allocation10 + $0x48] sm:$0xff]
    %v843 = vld [vmem:[#allocation10 + $0x50] sm:$0xff]
    %v844 = vld [vmem:[#allocation10 + $0x58] sm:$0xff]
    %v845 = vld [vmem:[#allocation10 + $0x60] sm:$0xff]
    %v846 = vld [vmem:[#allocation10 + $0x68] sm:$0xff]
    %v847 = vld [vmem:[#allocation10 + $0x70] sm:$0xff]
    %v848 = vld [vmem:[#allocation10 + $0x78] sm:$0xff]
    %849 = vmatprep.subr.mxu0 0.0
    %850 = vmatpush1.msra.mxu0 %v848
    %851 = vmatprep.subr.mxu0 0.0
    %852 = vmatpush1.msra.mxu0 %v847
    %853 = vmatprep.subr.mxu0 0.0
    %854 = vmatpush1.msra.mxu0 %v846
    %855 = vmatprep.subr.mxu0 0.0
    %856 = vmatpush1.msra.mxu0 %v845
    %857 = vmatprep.subr.mxu0 0.0
    %858 = vmatpush1.msra.mxu0 %v844
    %859 = vmatprep.subr.mxu0 0.0
    %860 = vmatpush1.msra.mxu0 %v843
    %861 = vmatprep.subr.mxu0 0.0
    %862 = vmatpush1.msra.mxu0 %v842
    %863 = vmatprep.subr.mxu0 0.0
    %864 = vmatpush1.msra.mxu0 %v841
    %865 = vmatprep.subr.mxu0 0.0
    %866 = vmatpush1.msra.mxu0 %v840
    %867 = vmatprep.subr.mxu0 0.0
    %868 = vmatpush1.msra.mxu0 %v839
    %869 = vmatprep.subr.mxu0 0.0
    %870 = vmatpush1.msra.mxu0 %v838
    %871 = vmatprep.subr.mxu0 0.0
    %872 = vmatpush1.msra.mxu0 %v837
    %873 = vmatprep.subr.mxu0 0.0
    %874 = vmatpush1.msra.mxu0 %v836
    %875 = vmatprep.subr.mxu0 0.0
    %876 = vmatpush1.msra.mxu0 %v835
    %877 = vmatprep.subr.mxu0 0.0
    %878 = vmatpush1.msra.mxu0 %v834
    %879 = vmatprep.subr.mxu0 0.0
    %880 = vmatpush1.msra.mxu0 %v833
    %881 = vmatprep.subr.mxu0 0.0
    %882 = vmatpush2.msra.mxu0 0.0
    %883 = vmatprep.subr.mxu0 0.0
    %884 = vmatpush2.msra.mxu0 0.0
    %885 = vmatprep.subr.mxu0 0.0
    %886 = vmatpush2.msra.mxu0 0.0
    %887 = vmatprep.subr.mxu0 0.0
    %888 = vmatpush2.msra.mxu0 0.0
    %889 = vmatprep.subr.mxu0 0.0
    %890 = vmatpush2.msra.mxu0 0.0
    %891 = vmatprep.subr.mxu0 0.0
    %892 = vmatpush2.msra.mxu0 0.0
    %893 = vmatprep.subr.mxu0 0.0
    %894 = vmatpush2.msra.mxu0 0.0
    %895 = vmatprep.subr.mxu0 0.0
    %896 = vmatpush2.msra.mxu0 0.0
    %897 = vmatprep.subr.mxu0 0.0
    %898 = vmatpush2.msra.mxu0 0.0
    %899 = vmatprep.subr.mxu0 0.0
    %900 = vmatpush2.msra.mxu0 0.0
    %901 = vmatprep.subr.mxu0 0.0
    %902 = vmatpush2.msra.mxu0 0.0
    %903 = vmatprep.subr.mxu0 0.0
    %904 = vmatpush2.msra.mxu0 0.0
    %905 = vmatprep.subr.mxu0 0.0
    %906 = vmatpush2.msra.mxu0 0.0
    %907 = vmatprep.subr.mxu0 0.0
    %908 = vmatpush2.msra.mxu0 0.0
    %909 = vmatprep.subr.mxu0 0.0
    %910 = vmatpush2.msra.mxu0 0.0
    %911 = vmatprep.subr.mxu0 0.0
    %912 = vmatpush2.msra.mxu0 0.0
    %913 = vmatprep.mubr.f32.mxu0 0.0
    %914 = vmatmul.mubr.f32.gmra.mxu0 %v155
    %v915 = vpop.f32.mrf.mxu0
    %v916 = vadd.f32 0.0, %v915
    %v917 = vpop.f32.mrf.mxu0
    %918 = vmatprep.mubr.f32.mxu0 0.0
    %919 = vmatmul.mubr.f32.gmra.mxu0 %v156
    %v920 = vpop.f32.mrf.mxu0
    %v921 = vadd.f32 0.0, %v920
    %v922 = vpop.f32.mrf.mxu0
    %923 = vmatprep.mubr.f32.mxu0 0.0
    %924 = vmatmul.mubr.f32.gmra.mxu0 %v157
    %v925 = vpop.f32.mrf.mxu0
    %v926 = vadd.f32 0.0, %v925
    %v927 = vpop.f32.mrf.mxu0
    %928 = vmatprep.mubr.f32.mxu0 0.0
    %929 = vmatmul.mubr.f32.gmra.mxu0 %v158
    %v930 = vpop.f32.mrf.mxu0
    %v931 = vadd.f32 0.0, %v930
    %v932 = vpop.f32.mrf.mxu0
    %933 = vdwg.mxu0
    %v935 = vlaneseq
    %v936 = vshrl.u32 %v935, 7
    %v937 = vsub.s32 0, %v936
    %v938 = vrot.slane %v832, %v937
    %v940 = vadd.f32 %v938, %v916
    %v941 = vadd.f32 %v938, %v921
    %v942 = vadd.f32 %v938, %v926
    %v943 = vadd.f32 %v938, %v931
    %v944 = vld [vmem:[#allocation11] sm:$0xff]
    %v945 = vld [vmem:[#allocation11 + $0x8] sm:$0xff]
    %v946 = vld [vmem:[#allocation11 + $0x10] sm:$0xff]
    %v947 = vld [vmem:[#allocation11 + $0x18] sm:$0xff]
    %v948 = vld [vmem:[#allocation11 + $0x20] sm:$0xff]
    %v949 = vld [vmem:[#allocation11 + $0x28] sm:$0xff]
    %v950 = vld [vmem:[#allocation11 + $0x30] sm:$0xff]
    %v951 = vld [vmem:[#allocation11 + $0x38] sm:$0xff]
    %v952 = vld [vmem:[#allocation11 + $0x40] sm:$0xff]
    %v953 = vld [vmem:[#allocation11 + $0x48] sm:$0xff]
    %v954 = vld [vmem:[#allocation11 + $0x50] sm:$0xff]
    %v955 = vld [vmem:[#allocation11 + $0x58] sm:$0xff]
    %v956 = vld [vmem:[#allocation11 + $0x60] sm:$0xff]
    %v957 = vld [vmem:[#allocation11 + $0x68] sm:$0xff]
    %v958 = vld [vmem:[#allocation11 + $0x70] sm:$0xff]
    %v959 = vld [vmem:[#allocation11 + $0x78] sm:$0xff]
    %960 = vmatprep.subr.mxu0 0.0
    %961 = vmatpush1.msra.mxu0 %v959
    %962 = vmatprep.subr.mxu0 0.0
    %963 = vmatpush1.msra.mxu0 %v958
    %964 = vmatprep.subr.mxu0 0.0
    %965 = vmatpush1.msra.mxu0 %v957
    %966 = vmatprep.subr.mxu0 0.0
    %967 = vmatpush1.msra.mxu0 %v956
    %968 = vmatprep.subr.mxu0 0.0
    %969 = vmatpush1.msra.mxu0 %v955
    %970 = vmatprep.subr.mxu0 0.0
    %971 = vmatpush1.msra.mxu0 %v954
    %972 = vmatprep.subr.mxu0 0.0
    %973 = vmatpush1.msra.mxu0 %v953
    %974 = vmatprep.subr.mxu0 0.0
    %975 = vmatpush1.msra.mxu0 %v952
    %976 = vmatprep.subr.mxu0 0.0
    %977 = vmatpush1.msra.mxu0 %v951
    %978 = vmatprep.subr.mxu0 0.0
    %979 = vmatpush1.msra.mxu0 %v950
    %980 = vmatprep.subr.mxu0 0.0
    %981 = vmatpush1.msra.mxu0 %v949
    %982 = vmatprep.subr.mxu0 0.0
    %983 = vmatpush1.msra.mxu0 %v948
    %984 = vmatprep.subr.mxu0 0.0
    %985 = vmatpush1.msra.mxu0 %v947
    %986 = vmatprep.subr.mxu0 0.0
    %987 = vmatpush1.msra.mxu0 %v946
    %988 = vmatprep.subr.mxu0 0.0
    %989 = vmatpush1.msra.mxu0 %v945
    %990 = vmatprep.subr.mxu0 0.0
    %991 = vmatpush1.msra.mxu0 %v944
    %992 = vmatprep.subr.mxu0 0.0
    %993 = vmatpush2.msra.mxu0 0.0
    %994 = vmatprep.subr.mxu0 0.0
    %995 = vmatpush2.msra.mxu0 0.0
    %996 = vmatprep.subr.mxu0 0.0
    %997 = vmatpush2.msra.mxu0 0.0
    %998 = vmatprep.subr.mxu0 0.0
    %999 = vmatpush2.msra.mxu0 0.0
    %1000 = vmatprep.subr.mxu0 0.0
    %1001 = vmatpush2.msra.mxu0 0.0
    %1002 = vmatprep.subr.mxu0 0.0
    %1003 = vmatpush2.msra.mxu0 0.0
    %1004 = vmatprep.subr.mxu0 0.0
    %1005 = vmatpush2.msra.mxu0 0.0
    %1006 = vmatprep.subr.mxu0 0.0
    %1007 = vmatpush2.msra.mxu0 0.0
    %1008 = vmatprep.subr.mxu0 0.0
    %1009 = vmatpush2.msra.mxu0 0.0
    %1010 = vmatprep.subr.mxu0 0.0
    %1011 = vmatpush2.msra.mxu0 0.0
    %1012 = vmatprep.subr.mxu0 0.0
    %1013 = vmatpush2.msra.mxu0 0.0
    %1014 = vmatprep.subr.mxu0 0.0
    %1015 = vmatpush2.msra.mxu0 0.0
    %1016 = vmatprep.subr.mxu0 0.0
    %1017 = vmatpush2.msra.mxu0 0.0
    %1018 = vmatprep.subr.mxu0 0.0
    %1019 = vmatpush2.msra.mxu0 0.0
    %1020 = vmatprep.subr.mxu0 0.0
    %1021 = vmatpush2.msra.mxu0 0.0
    %1022 = vmatprep.subr.mxu0 0.0
    %1023 = vmatpush2.msra.mxu0 0.0
    %1024 = vmatprep.mubr.f32.mxu0 0.0
    %1025 = vmatmul.mubr.f32.gmra.mxu0 %v518
    %v1026 = vpop.f32.mrf.mxu0
    %v1027 = vadd.f32 0.0, %v1026
    %v1028 = vpop.f32.mrf.mxu0
    %1029 = vmatprep.mubr.f32.mxu0 0.0
    %1030 = vmatmul.mubr.f32.gmra.mxu0 %v519
    %v1031 = vpop.f32.mrf.mxu0
    %v1032 = vadd.f32 0.0, %v1031
    %v1033 = vpop.f32.mrf.mxu0
    %1034 = vmatprep.mubr.f32.mxu0 0.0
    %1035 = vmatmul.mubr.f32.gmra.mxu0 %v520
    %v1036 = vpop.f32.mrf.mxu0
    %v1037 = vadd.f32 0.0, %v1036
    %v1038 = vpop.f32.mrf.mxu0
    %1039 = vmatprep.mubr.f32.mxu0 0.0
    %1040 = vmatmul.mubr.f32.gmra.mxu0 %v521
    %v1041 = vpop.f32.mrf.mxu0
    %v1042 = vadd.f32 0.0, %v1041
    %v1043 = vpop.f32.mrf.mxu0
    %1044 = vdwg.mxu0
    %v1045 = vadd.f32 %v940, %v1027
    %v1046 = vadd.f32 %v941, %v1032
    %v1047 = vadd.f32 %v942, %v1037
    %v1048 = vadd.f32 %v943, %v1042
    %v1049 = vld [vmem:[#allocation13] sm:$0xff]
    %v1050 = vld [vmem:[#allocation13 + $0x8] sm:$0xff]
    %v1051 = vld [vmem:[#allocation13 + $0x10] sm:$0xff]
    %v1052 = vld [vmem:[#allocation13 + $0x18] sm:$0xff]
    %v1053 = vld [vmem:[#allocation13 + $0x20] sm:$0xff]
    %v1054 = vld [vmem:[#allocation13 + $0x28] sm:$0xff]
    %v1055 = vld [vmem:[#allocation13 + $0x30] sm:$0xff]
    %v1056 = vld [vmem:[#allocation13 + $0x38] sm:$0xff]
    %v1057 = vld [vmem:[#allocation13 + $0x40] sm:$0xff]
    %v1058 = vld [vmem:[#allocation13 + $0x48] sm:$0xff]
    %v1059 = vld [vmem:[#allocation13 + $0x50] sm:$0xff]
    %v1060 = vld [vmem:[#allocation13 + $0x58] sm:$0xff]
    %v1061 = vld [vmem:[#allocation13 + $0x60] sm:$0xff]
    %v1062 = vld [vmem:[#allocation13 + $0x68] sm:$0xff]
    %v1063 = vld [vmem:[#allocation13 + $0x70] sm:$0xff]
    %v1064 = vld [vmem:[#allocation13 + $0x78] sm:$0xff]
    %1065 = vmatprep.subr.mxu0 0.0
    %1066 = vmatpush1.msra.mxu0 %v1064
    %1067 = vmatprep.subr.mxu0 0.0
    %1068 = vmatpush1.msra.mxu0 %v1063
    %1069 = vmatprep.subr.mxu0 0.0
    %1070 = vmatpush1.msra.mxu0 %v1062
    %1071 = vmatprep.subr.mxu0 0.0
    %1072 = vmatpush1.msra.mxu0 %v1061
    %1073 = vmatprep.subr.mxu0 0.0
    %1074 = vmatpush1.msra.mxu0 %v1060
    %1075 = vmatprep.subr.mxu0 0.0
    %1076 = vmatpush1.msra.mxu0 %v1059
    %1077 = vmatprep.subr.mxu0 0.0
    %1078 = vmatpush1.msra.mxu0 %v1058
    %1079 = vmatprep.subr.mxu0 0.0
    %1080 = vmatpush1.msra.mxu0 %v1057
    %1081 = vmatprep.subr.mxu0 0.0
    %1082 = vmatpush1.msra.mxu0 %v1056
    %1083 = vmatprep.subr.mxu0 0.0
    %1084 = vmatpush1.msra.mxu0 %v1055
    %1085 = vmatprep.subr.mxu0 0.0
    %1086 = vmatpush1.msra.mxu0 %v1054
    %1087 = vmatprep.subr.mxu0 0.0
    %1088 = vmatpush1.msra.mxu0 %v1053
    %1089 = vmatprep.subr.mxu0 0.0
    %1090 = vmatpush1.msra.mxu0 %v1052
    %1091 = vmatprep.subr.mxu0 0.0
    %1092 = vmatpush1.msra.mxu0 %v1051
    %1093 = vmatprep.subr.mxu0 0.0
    %1094 = vmatpush1.msra.mxu0 %v1050
    %1095 = vmatprep.subr.mxu0 0.0
    %1096 = vmatpush1.msra.mxu0 %v1049
    %1097 = vmatprep.subr.mxu0 0.0
    %1098 = vmatpush2.msra.mxu0 0.0
    %1099 = vmatprep.subr.mxu0 0.0
    %1100 = vmatpush2.msra.mxu0 0.0
    %1101 = vmatprep.subr.mxu0 0.0
    %1102 = vmatpush2.msra.mxu0 0.0
    %1103 = vmatprep.subr.mxu0 0.0
    %1104 = vmatpush2.msra.mxu0 0.0
    %1105 = vmatprep.subr.mxu0 0.0
    %1106 = vmatpush2.msra.mxu0 0.0
    %1107 = vmatprep.subr.mxu0 0.0
    %1108 = vmatpush2.msra.mxu0 0.0
    %1109 = vmatprep.subr.mxu0 0.0
    %1110 = vmatpush2.msra.mxu0 0.0
    %1111 = vmatprep.subr.mxu0 0.0
    %1112 = vmatpush2.msra.mxu0 0.0
    %1113 = vmatprep.subr.mxu0 0.0
    %1114 = vmatpush2.msra.mxu0 0.0
    %1115 = vmatprep.subr.mxu0 0.0
    %1116 = vmatpush2.msra.mxu0 0.0
    %1117 = vmatprep.subr.mxu0 0.0
    %1118 = vmatpush2.msra.mxu0 0.0
    %1119 = vmatprep.subr.mxu0 0.0
    %1120 = vmatpush2.msra.mxu0 0.0
    %1121 = vmatprep.subr.mxu0 0.0
    %1122 = vmatpush2.msra.mxu0 0.0
    %1123 = vmatprep.subr.mxu0 0.0
    %1124 = vmatpush2.msra.mxu0 0.0
    %1125 = vmatprep.subr.mxu0 0.0
    %1126 = vmatpush2.msra.mxu0 0.0
    %1127 = vmatprep.subr.mxu0 0.0
    %1128 = vmatpush2.msra.mxu0 0.0
    %1129 = vmatprep.mubr.f32.mxu0 0.0
    %1130 = vmatmul.mubr.f32.gmra.mxu0 %v828
    %v1131 = vpop.f32.mrf.mxu0
    %v1132 = vadd.f32 0.0, %v1131
    %v1133 = vpop.f32.mrf.mxu0
    %1134 = vmatprep.mubr.f32.mxu0 0.0
    %1135 = vmatmul.mubr.f32.gmra.mxu0 %v829
    %v1136 = vpop.f32.mrf.mxu0
    %v1137 = vadd.f32 0.0, %v1136
    %v1138 = vpop.f32.mrf.mxu0
    %1139 = vmatprep.mubr.f32.mxu0 0.0
    %1140 = vmatmul.mubr.f32.gmra.mxu0 %v830
    %v1141 = vpop.f32.mrf.mxu0
    %v1142 = vadd.f32 0.0, %v1141
    %v1143 = vpop.f32.mrf.mxu0
    %1144 = vmatprep.mubr.f32.mxu0 0.0
    %1145 = vmatmul.mubr.f32.gmra.mxu0 %v831
    %v1146 = vpop.f32.mrf.mxu0
    %v1147 = vadd.f32 0.0, %v1146
    %v1148 = vpop.f32.mrf.mxu0
    %1149 = vdwg.mxu0
    %v1150 = vadd.f32 %v1045, %v1132
    %v1151 = vadd.f32 %v1046, %v1137
    %v1152 = vadd.f32 %v1047, %v1142
    %v1153 = vadd.f32 %v1048, %v1147
    %1154 = vst [vmem:[#allocation14] sm:$0xff] %v1150
    %1155 = vst [vmem:[#allocation14 + $0x8] sm:$0xff] %v1151
    %1156 = vst [vmem:[#allocation14 + $0x10] sm:$0xff] %v1152
    %1157 = vst [vmem:[#allocation14 + $0x18] sm:$0xff] %v1153
    // Predicated region
    $region86: #{tpu_custom_call.1} parent=1 // pred_check
      _
    $region87: #{tpu_custom_call.1} parent=1 // pred_check_branch
      %1159 = sbr.rel (0) target = $region89
    $region88: #{tpu_custom_call.1} parent=1 // pred_region
      %s1161 = ssub.s32 512, 512
      %1162 = vsyncadd [#allocation4], %s1161
      %s1163 = sshll.u32 [#allocation14], 4
      %s1164 = int_to_ptr.vmem [resolvable:$true] %s1163
      %1169 = dma.vmem_to_hbm [thread:$0]  %s1164, 512, %s14, [#allocation4], 128, 128, 8
    $region89: #{tpu_custom_call.1} parent=1 // pred_fallthru
      _
    // Predicated region
    $region90: #{tpu_custom_call.1} parent=1 // pred_check
      _
    $region91: #{tpu_custom_call.1} parent=1 // pred_check_branch
      %1171 = sbr.rel (0) target = $region93
    $region92: #{tpu_custom_call.1} parent=1 // pred_region
      %1172 = dma.done [#allocation4], 512
    $region93: #{tpu_custom_call.1} parent=1 // pred_fallthru
      _
    %1173 = vsyncpa [#allocation3], 1
    %1174 = vsyncpa [#allocation6], 1
    %1175 = vsyncpa [#allocation9], 1
    %1176 = vsyncpa [#allocation12], 1
    %1177 = vsyncpa [#allocation4], 1

</llo_original>
